<compile_context>
chip_gen: v5e
topology: v5e:2x2
jax: 0.10.0
libtpu: 0.0.40
codegen_flags: <defaults>
</compile_context>

<pallas_src>
import jax
import jax.numpy as jnp
from jax.experimental import pallas as pl
from jax.experimental.pallas import tpu as pltpu


def _normalize_kernel(sb_ref, img_ref, out_ref):
    # sb_ref: VMEM f32[rows, 2] (col 0 = scale, col 1 = bias)
    # img_ref / out_ref: VMEM [rows, cols] in the input dtype.
    scale = sb_ref[:, 0:1]                       # f32[rows, 1], lane-broadcasts
    bias = sb_ref[:, 1:2]                        # f32[rows, 1]
    x = img_ref[...].astype(jnp.float32)
    out_ref[...] = (x * scale + bias).astype(out_ref.dtype)


def _min_sublane_rows(itemsize):
    # (sublane, 128) native tiling rule depends on element packing.
    return {4: 8, 2: 16, 1: 32}.get(itemsize, 8)


def _target_block_bytes():
    """Generation-aware per-block byte target (best effort, safe fallback)."""
    try:
        info = pltpu.get_tpu_info()
        vmem = getattr(info, "vmem_capacity_bytes", None)
        if vmem is not None and vmem <= 80 * 1024 * 1024:
            # v7x-class: ~2.3x v6e HBM bandwidth -> larger blocks amortize the
            # fixed per-grid-step overhead; 4x4 MiB + side tiles stays well
            # under the 32 MiB scoped default / 64 MiB physical VMEM.
            return 4 * 1024 * 1024
    except Exception:
        pass
    # v5e / v6e (and unknown): ~2 MiB blocks are already at the HBM roofline
    # sweet spot and safely inside v5e's 16 MiB scoped-VMEM default.
    return 2 * 1024 * 1024


def _pick_blocks(R, L, itemsize, target_bytes):
    """Choose (row_block, col_block) obeying the native tiling rule without
    ever exceeding target_bytes per block.

    Prefers col_block == L (full contiguous rows, single-descriptor DMA per
    tile); only when even `sub` full-width rows exceed the budget does it fall
    back to a column split, capping col_block FIRST so the minimum-height block
    still fits the budget.
    """
    sub = _min_sublane_rows(itemsize)

    if sub * L * itemsize <= target_bytes or L <= 128:
        # Full-width rows fit: shrink the row count instead of splitting cols.
        col_block = L
        rows = max(sub, target_bytes // max(1, L * itemsize))
        if rows >= R:
            row_block = R
        else:
            row_block = min(R, max(sub, (rows // sub) * sub))
    else:
        # Row too wide: cap columns so that `sub` rows respect the budget.
        col_block = (target_bytes // (sub * itemsize)) // 128 * 128
        col_block = min(L, max(128, col_block))
        row_block = min(R, sub)
    return row_block, col_block


def normalize(img, mean, std):
    """img: [B, C, H, W]; mean, std: [C]. Returns (img - mean) / std."""
    B, C, H, W = img.shape
    assert mean.shape == (C,) and std.shape == (C,)

    R, L = B * C, H * W
    x = img.reshape(R, L)
    itemsize = img.dtype.itemsize

    # Fold mean/std into per-channel scale/bias (tiny wrapper-side op), kept in
    # f32 for precision, expanded to one row per (b, c) of the flattened view
    # and packed into a single (R, 2) side input.
    inv_std = 1.0 / std.astype(jnp.float32)                       # f32[C]
    scale = jnp.tile(inv_std, B)                                   # f32[R]
    bias = jnp.tile(-mean.astype(jnp.float32) * inv_std, B)        # f32[R]
    scale_bias = jnp.stack([scale, bias], axis=1)                  # f32[R, 2]

    target_bytes = _target_block_bytes()
    row_block, col_block = _pick_blocks(R, L, itemsize, target_bytes)

    # Explicit VMEM budget: double-buffered input + output blocks, plus the
    # packed (rows, 2) f32 side tiles (lane-padded to 128), plus ~25% slack.
    block_bytes = row_block * col_block * itemsize
    sb_tile_bytes = row_block * 128 * 4
    vmem_limit = int((4 * block_bytes + 2 * sb_tile_bytes) * 1.25) + (1 << 20)
    vmem_limit = min(vmem_limit, 64 * 1024 * 1024)

    if col_block == L:
        # Full-width tiles: 1-D grid over rows only (one contiguous DMA/tile,
        # no re-visit of the scale/bias tile across a column axis).
        grid = (pl.cdiv(R, row_block),)
        img_spec = pl.BlockSpec((row_block, col_block), lambda i: (i, 0))
        sb_spec = pl.BlockSpec((row_block, 2), lambda i: (i, 0))
        dim_sem = ("parallel",)
    else:
        grid = (pl.cdiv(R, row_block), pl.cdiv(L, col_block))
        img_spec = pl.BlockSpec((row_block, col_block), lambda i, j: (i, j))
        sb_spec = pl.BlockSpec((row_block, 2), lambda i, j: (i, 0))
        dim_sem = ("parallel", "parallel")

    out_flat = pl.pallas_call(
        _normalize_kernel,
        out_shape=jax.ShapeDtypeStruct((R, L), img.dtype),
        grid=grid,
        in_specs=[sb_spec, img_spec],
        out_specs=img_spec,
        compiler_params=pltpu.CompilerParams(
            dimension_semantics=dim_sem,
            vmem_limit_bytes=vmem_limit,
        ),
    )(scale_bias, x)

    return out_flat.reshape(B, C, H, W)


if __name__ == "__main__":
    # Deterministic parameters from the module's __init__ (ImageNet stats).
    mean = jnp.array([0.485, 0.456, 0.406], dtype=jnp.float32)
    std = jnp.array([0.229, 0.224, 0.225], dtype=jnp.float32)

    # Small deterministic input: batch=2, channels=3 (required by mean/std), 16x16.
    key = jax.random.PRNGKey(0)
    img = jax.random.uniform(key, (2, 3, 16, 16), dtype=jnp.float32)

    out = normalize(img, mean, std)
    out = jax.block_until_ready(out)

    # Reference check against plain JAX (matches PyTorch forward semantics).
    ref = (img - mean[None, :, None, None]) / std[None, :, None, None]
    assert out.shape == ref.shape and out.dtype == ref.dtype
    assert jnp.allclose(out, ref, rtol=1e-5, atol=1e-5)

    print("KERNEL_OK")
</pallas_src>

<mosaic_0001>
module attributes {stable_mosaic.version = 11 : i64} {
  func.func @_normalize_kernel(%arg0: i32, %arg1: memref<6x2xf32, #tpu.memory_space<vmem>>, %arg2: memref<6x256xf32, #tpu.memory_space<vmem>>, %arg3: memref<6x256xf32, #tpu.memory_space<vmem>>) attributes {dimension_semantics = [#tpu.dimension_semantics<parallel>], iteration_bounds = array<i64: 1>, scalar_prefetch = 0 : i64, scratch_operands = 0 : i64, tpu.core_type = #tpu.core_type<tc>, window_params = [{transform_indices = @transform_0, window_bounds = array<i64: 6, 2>}, {transform_indices = @transform_1, window_bounds = array<i64: 6, 256>}, {transform_indices = @transform_2, window_bounds = array<i64: 6, 256>}]} {
    %c0 = arith.constant 0 : index
    %c0_0 = arith.constant 0 : index
    %0 = vector.load %arg1[%c0, %c0_0] : memref<6x2xf32, #tpu.memory_space<vmem>>, vector<6x1xf32>
    %c0_1 = arith.constant 0 : index
    %c1 = arith.constant 1 : index
    %1 = vector.load %arg1[%c0_1, %c1] : memref<6x2xf32, #tpu.memory_space<vmem>>, vector<6x1xf32>
    %c0_2 = arith.constant 0 : index
    %c0_3 = arith.constant 0 : index
    %2 = vector.load %arg2[%c0_2, %c0_3] : memref<6x256xf32, #tpu.memory_space<vmem>>, vector<6x256xf32>
    %3 = vector.broadcast %0 : vector<6x1xf32> to vector<6x256xf32>
    %4 = arith.mulf %2, %3 : vector<6x256xf32>
    %5 = vector.broadcast %1 : vector<6x1xf32> to vector<6x256xf32>
    %6 = arith.addf %4, %5 : vector<6x256xf32>
    %c0_4 = arith.constant 0 : index
    %c0_5 = arith.constant 0 : index
    %7 = vector.load %arg3[%c0_4, %c0_5] : memref<6x256xf32, #tpu.memory_space<vmem>>, vector<6x256xf32>
    tpu.vector_store %arg3[%c0_4, %c0_5], %6 {strides = array<i32>} : memref<6x256xf32, #tpu.memory_space<vmem>>, vector<6x256xf32>,
    return
  }
  func.func @transform_0(%arg0: i32) -> (i32, i32) {
    %c0_i32 = arith.constant 0 : i32
    %c0_i32_0 = arith.constant 0 : i32
    return %arg0, %c0_i32 : i32, i32
  }
  func.func @transform_1(%arg0: i32) -> (i32, i32) {
    %c0_i32 = arith.constant 0 : i32
    %c0_i32_0 = arith.constant 0 : i32
    return %arg0, %c0_i32 : i32, i32
  }
  func.func @transform_2(%arg0: i32) -> (i32, i32) {
    %c0_i32 = arith.constant 0 : i32
    %c0_i32_0 = arith.constant 0 : i32
    return %arg0, %c0_i32 : i32, i32
  }
}

</mosaic_0001>

<llo_original>
// kernel: tpu_custom_call.1
$region0: #{tpu_custom_call.1}
  #allocation0 [shape = 'u32[]', space=smem, size = 0x4, offset = 0x4, fixed_abs, tag = 'smem constant byte address 0x4 - core index']
  #allocation1 [shape = 'u32[72,128]{1,0:T(1,128)}', space=vmem, size = 0x9000, scoped, tag = 'internal scratch']
  %s0 = inlined_call_operand.vmem [shape: f32[6,2], index: 0, kind: input, shape index: {}]
  %s1 = inlined_call_operand.hbm [shape: f32[6,256], index: 1, kind: input, shape index: {}]
  %s2 = inlined_call_operand.hbm [shape: f32[6,256], index: 2, kind: output, shape index: {}]
  %s3 = sld [smem:[#allocation0]]
  $region22: #{tpu_custom_call.1} parent=0
    _
  %s5 = ssub.s32 1, %s3
  %s6 = scalar_select 0, %s5, %s3
  $region1: #{tpu_custom_call.1} parent=0
    #allocation2 [shape = 'u8[8192]{0}', space=vmem, size = 0x2000, scoped, tag = 'input window, operand 1, single buffered']
    #allocation3 [shape = 's32[1]{0}', space=sflag, size = 0x4, scoped, tag = 'scoped memory for tpu_custom_call.1']
    #allocation4 [shape = 's32[1]{0}', space=sflag, size = 0x4, scoped, tag = 'scoped memory for tpu_custom_call.1']
    #allocation5 [shape = 'u8[8192]{0}', space=vmem, size = 0x2000, scoped, tag = 'output window, operand 0, single buffered']
    %7 = vsyncpa [#allocation3], 0
    %8 = vsyncpa [#allocation4], 0
    // Predicated region
    $region2: #{tpu_custom_call.1} parent=1 // pred_check
      _
    $region3: #{tpu_custom_call.1} parent=1 // pred_check_branch
      %10 = sbr.rel (0) target = $region5
    $region4: #{tpu_custom_call.1} parent=1 // pred_region
      _
    $region5: #{tpu_custom_call.1} parent=1 // pred_fallthru
      _
    // Predicated region
    $region6: #{tpu_custom_call.1} parent=1 // pred_check
      _
    $region7: #{tpu_custom_call.1} parent=1 // pred_check_branch
      %12 = sbr.rel (0) target = $region9
    $region8: #{tpu_custom_call.1} parent=1 // pred_region
      %14 = vsyncadd [#allocation3], 0
      %s16 = sshll.u32 %s1, 4
      %s17 = int_to_ptr.hbm [resolvable:$true] %s16
      %s18 = sshll.u32 [#allocation2], 4
      %s19 = int_to_ptr.vmem [resolvable:$true] %s18
      %21 = dma.hbm_to_vmem [thread:$0]  %s17, 256, %s19, [#allocation3]
    $region9: #{tpu_custom_call.1} parent=1 // pred_fallthru
      _
    // Predicated region
    $region10: #{tpu_custom_call.1} parent=1 // pred_check
      _
    $region11: #{tpu_custom_call.1} parent=1 // pred_check_branch
      %23 = sbr.rel (0) target = $region13
    $region12: #{tpu_custom_call.1} parent=1 // pred_region
      %25 = dma.done [#allocation3], 256
    $region13: #{tpu_custom_call.1} parent=1 // pred_fallthru
      _
    %v26 = vld [vmem:[%s0] sm:$0x3f]
    %v27 = vld [vmem:[#allocation2] sm:$0x3f]
    %v28 = vld [vmem:[#allocation2 + $0x8] sm:$0x3f]
    %30 = vset.pattern.permute.xlu0 0
    %31 = vperm.xlu0 %30, %v26
    %v32 = vpop.permute.xlu0 %31
    %v34 = vmul.f32 %v27, %v32
    %v35 = vmul.f32 %v28, %v32
    %36 = vset.pattern.permute.xlu0 1
    %37 = vperm.xlu0 %36, %v26
    %v38 = vpop.permute.xlu0 %37
    %v40 = vadd.f32 %v34, %v38
    %v41 = vadd.f32 %v35, %v38
    %42 = vst [vmem:[#allocation5] sm:$0x3f] %v40
    %43 = vst [vmem:[#allocation5 + $0x8] sm:$0x3f] %v41
    // Predicated region
    $region14: #{tpu_custom_call.1} parent=1 // pred_check
      _
    $region15: #{tpu_custom_call.1} parent=1 // pred_check_branch
      %45 = sbr.rel (0) target = $region17
    $region16: #{tpu_custom_call.1} parent=1 // pred_region
      %47 = vsyncadd [#allocation4], 0
      %s49 = sshll.u32 [#allocation5], 4
      %s50 = int_to_ptr.vmem [resolvable:$true] %s49
      %s51 = sshll.u32 %s2, 4
      %s52 = int_to_ptr.hbm [resolvable:$true] %s51
      %54 = dma.vmem_to_hbm [thread:$0]  %s50, 256, %s52, [#allocation4]
    $region17: #{tpu_custom_call.1} parent=1 // pred_fallthru
      _
    // Predicated region
    $region18: #{tpu_custom_call.1} parent=1 // pred_check
      _
    $region19: #{tpu_custom_call.1} parent=1 // pred_check_branch
      %56 = sbr.rel (0) target = $region21
    $region20: #{tpu_custom_call.1} parent=1 // pred_region
      %58 = dma.done [#allocation4], 256
    $region21: #{tpu_custom_call.1} parent=1 // pred_fallthru
      _
    %59 = vsyncpa [#allocation3], 1
    %60 = vsyncpa [#allocation4], 1

</llo_original>
